<compile_context>
chip_gen: v5e
topology: v5e:2x2
jax: 0.10.0
libtpu: 0.0.40
codegen_flags: <defaults>
</compile_context>

<pallas_src>
import functools

import jax
import jax.numpy as jnp
import numpy as np
from jax.experimental import pallas as pl
from jax.experimental.pallas import tpu as pltpu

_NEG = -1e30  # mask_logits fill value (standard TAN implementation)


def _round_up(x, m):
    return (x + m - 1) // m * m


# ---------------------------------------------------------------------------
# Kernel: place the pre-skewed diagonal slab into the dense output row tile.
# ---------------------------------------------------------------------------
def _tan2d_place_kernel(slab_ref, out_ref, *, N, TI, TIW, NI):
    # slab_ref: (TI, TIW, Dp)  slab[r, c, :] = band value of output row
    #                          i0 + r at output column i0 + c (zero off-band,
    #                          zero for masked / out-of-range columns).
    # out_ref : (TI, N, Dp)    dense output row tile (zeros outside the band).
    t = pl.program_id(1)

    out_ref[...] = jnp.zeros_like(out_ref)

    # Tiles whose slab fits entirely inside the N output columns.
    n_full = (N - TIW) // TI + 1 if N >= TIW else 0

    if n_full > 0:
        @pl.when(t < n_full)
        def _full_tile():
            i0 = t * TI
            if TI % 8 == 0:
                i0 = pl.multiple_of(i0, 8)        # sublane-aligned store
            out_ref[:, pl.ds(i0, TIW), :] = slab_ref[...]

    # The (few) tiles covering the last weff-1 columns / padded rows: clip the
    # slab with a statically-sized store per tile index.
    for tc in range(n_full, NI):
        width = N - tc * TI                        # in (0, TIW)

        @pl.when(t == tc)
        def _clipped_tile(tc=tc, width=width):
            out_ref[:, pl.ds(tc * TI, width), :] = slab_ref[:, :width, :]


# ---------------------------------------------------------------------------
# Wrapper: budgeting, band/slab prepass (plain XLA), pallas_call, integer tail.
# ---------------------------------------------------------------------------
def _vmem_capacity_bytes():
    try:
        return int(pltpu.get_tpu_info().vmem_capacity_bytes)
    except Exception:
        return 64 * 1024 * 1024            # conservative: v7x per-TensorCore


def _pick_row_tile(N, weff, Dp, itemsize, budget_bytes, cap=None):
    """Output-row tile: ~2-8 MiB out block, double-buffered blocks <= budget."""
    out_row = _round_up(N, 8) * Dp * itemsize

    target_out_block = min(8 << 20, max(2 << 20, budget_bytes // 6))
    ti = max(1, int(target_out_block // out_row))
    if cap is not None:
        ti = min(ti, int(cap))
    ti = max(1, min(ti, N))

    def _fits(t):                                  # 2x (out block + slab block)
        slab_row = _round_up(t + weff - 1, 8) * Dp * itemsize
        return 2 * t * (out_row + slab_row) <= budget_bytes

    while ti > 1 and not _fits(ti):
        ti -= 1

    # Prefer a divisor of N (no row padding, no post-call slice of the output).
    for cand in range(ti, 0, -1):
        if N % cand == 0 and (2 * cand >= ti or cand >= 8):
            return cand
    # Awkward N (e.g. prime): keep the budgeted tile (multiple of 8 when
    # possible) and pad the row dim instead of degrading to TI == 1.
    if ti >= 8:
        ti -= ti % 8
    return ti


def tan2d_proposal(feats, mask, *, downscale=8, windows=(16,), row_tile_cap=None):
    """JAX/Pallas equivalent of TAN2dProposal.forward.

    feats: (B, T, D) float, mask: (B, T) float (0/1).
    Returns (feat2d (B, N*N, D), bounds (B, N*N, 2) int32, mask2d (B, N*N)).
    """
    # TODO(synk): only the single-window-group path (len(windows) == 1, the
    # module default) is implemented; the multi-group MaxPool1d(3, 2) with
    # stride doubling between groups is not translated.
    assert len(windows) == 1
    B, T, D = feats.shape
    scale = downscale
    # TODO(synk): PyTorch's MaxPool1d floor-divides non-divisible T; we fail
    # loudly instead of silently diverging.
    assert T % scale == 0, "downscale1d assumed to see T divisible by scale"
    N = T // scale
    weff = min(windows[0], N)   # pooling loop breaks once length < kernel size
    assert weff >= 1

    out_dtype = feats.dtype
    itemsize = jnp.dtype(out_dtype).itemsize
    f32 = jnp.float32

    # ---- cheap prepass in plain XLA (O(weff*N*D)): mask_logits + max-pool,
    # running diagonal max ("band").  Removes the scale-padded (N, scale, D)
    # feats block and the grid-carried scratch from the kernel entirely. ----
    xm = feats.astype(f32) + (1.0 - mask.astype(f32))[..., None] * _NEG
    xd = jnp.max(xm.reshape(B, N, scale, D), axis=2)              # (B, N, D)
    sm = jnp.max(mask.astype(f32).reshape(B, N, scale), axis=2)   # (B, N)

    # Lane-dense feature dim for the writeback path (no-op when D % 128 == 0).
    Dp = _round_up(D, 128)
    if Dp != D:
        xd = jnp.pad(xd, ((0, 0), (0, 0), (0, Dp - D)))

    # band[b, i, d, :] = max(xd[b, i..i+d]) * sm[b, i+d]   (0 for i+d >= N)
    pooled = xd
    rows = []
    for d in range(weff):
        if d > 0:
            shifted = jnp.pad(xd[:, d:], ((0, 0), (0, d), (0, 0)),
                              constant_values=_NEG)
            pooled = jnp.maximum(pooled, shifted)
        smd = jnp.pad(sm[:, d:], ((0, 0), (0, d)))
        rows.append(pooled * smd[..., None])
    band = jnp.stack(rows, axis=2).astype(out_dtype)          # (B, N, weff, Dp)

    # ---- per-generation row-tile / VMEM budgeting ----
    vmem_cap = _vmem_capacity_bytes()
    budget = int(vmem_cap * 0.6)        # headroom for compiler scratch / splats
    TI = _pick_row_tile(N, weff, Dp, itemsize, budget, cap=row_tile_cap)
    TIW = TI + weff - 1
    NR = _round_up(N, TI)
    NI = NR // TI

    out_row = _round_up(N, 8) * Dp * itemsize
    slab_row = _round_up(TIW, 8) * Dp * itemsize
    need = 2 * TI * (out_row + slab_row) + (4 << 20)
    soft_cap = min(vmem_cap * 3 // 4, 100 << 20)  # ~48 MiB v7x, ~96 MiB v5e/v6e
    vmem_limit = int(min(max(need, 32 << 20), max(soft_cap, need)))

    # Skew the band into per-tile slabs: slab[b, t, r, c, :] = band value of
    # output row t*TI + r at output column t*TI + c.  Pure pad + reshape (the
    # classic skew trick), no gather.
    if NR != N:
        band = jnp.pad(band, ((0, 0), (0, NR - N), (0, 0), (0, 0)))
    slab = band.reshape(B, NI, TI, weff, Dp)
    slab = jnp.pad(slab, ((0, 0), (0, 0), (0, 0), (0, TI), (0, 0)))
    slab = slab.reshape(B, NI, TI * (weff + TI), Dp)[:, :, :TI * TIW, :]
    slab = slab.reshape(B, NI, TI, TIW, Dp)

    kernel = functools.partial(_tan2d_place_kernel, N=N, TI=TI, TIW=TIW, NI=NI)
    feat2d = pl.pallas_call(
        kernel,
        out_shape=jax.ShapeDtypeStruct((B, NR, N, Dp), out_dtype),
        grid=(B, NI),
        in_specs=[pl.BlockSpec((None, None, TI, TIW, Dp),
                               lambda b, t: (b, t, 0, 0, 0))],
        out_specs=pl.BlockSpec((None, TI, N, Dp), lambda b, t: (b, t, 0, 0)),
        compiler_params=pltpu.CompilerParams(
            dimension_semantics=("parallel", "parallel"),
            vmem_limit_bytes=vmem_limit,
        ),
    )(slab)

    if NR != N or Dp != D:       # only awkward N / non-lane-multiple D pay this
        feat2d = feat2d[:, :N, :, :D]

    # ---- small integer / mask glue (matches the PyTorch tail) ----
    smask = jnp.max(mask.reshape(B, N, scale), axis=-1)            # (B, N)
    idx = jnp.arange(N, dtype=jnp.int32)
    diag = idx[None, :] - idx[:, None]                             # col - row
    band2d = ((diag >= 0) & (diag < weff)).astype(mask.dtype)      # (N, N)
    mask2d = band2d[None, :, :] * smask[:, None, :]                # (B, N, N)

    b0 = jnp.broadcast_to((idx * scale)[None, :, None], (B, N, N))
    b1 = jnp.broadcast_to(((idx + 1) * scale - 1)[None, None, :], (B, N, N))
    bounds = jnp.stack([b0, b1], axis=-1)                          # (B, N, N, 2)
    lens = jnp.sum(mask, axis=-1).astype(jnp.int32)                # (B,)
    bounds = jnp.minimum(bounds, lens.reshape(B, 1, 1, 1) - 1)
    # TODO(synk): torch returns int64 ("long"); JAX default width is int32 here.
    bounds = bounds * mask2d[..., None].astype(jnp.int32)

    return (feat2d.reshape(B, N * N, D),
            bounds.reshape(B, N * N, 2),
            mask2d.reshape(B, N * N))


# ---------------------------------------------------------------------------
# Pure NumPy reference reproducing the PyTorch semantics.
# ---------------------------------------------------------------------------
def _reference(feats, mask, scale, window):
    feats = np.asarray(feats, np.float32)
    mask = np.asarray(mask, np.float32)
    B, T, D = feats.shape
    N = T // scale
    weff = min(window, N)
    xm = feats + (1.0 - mask)[..., None] * _NEG
    xd = xm.reshape(B, N, scale, D).max(axis=2)
    sm = mask.reshape(B, N, scale).max(axis=2)
    feat2d = np.zeros((B, N, N, D), np.float32)
    mask2d = np.zeros((B, N, N), np.float32)
    for i in range(N):
        for j in range(i, min(i + weff, N)):
            feat2d[:, i, j] = xd[:, i:j + 1].max(axis=1) * sm[:, j][:, None]
            mask2d[:, i, j] = sm[:, j]
    idx = np.arange(N)
    b0 = np.broadcast_to((idx * scale)[None, :, None], (B, N, N))
    b1 = np.broadcast_to(((idx + 1) * scale - 1)[None, None, :], (B, N, N))
    bounds = np.stack([b0, b1], axis=-1)
    lens = mask.sum(-1).astype(np.int64)
    bounds = np.minimum(bounds, lens.reshape(B, 1, 1, 1) - 1)
    bounds = bounds * mask2d[..., None].astype(np.int64)
    return (feat2d.reshape(B, N * N, D).astype(np.float32),
            bounds.reshape(B, N * N, 2).astype(np.int32),
            mask2d.reshape(B, N * N))


if __name__ == "__main__":
    key = jax.random.PRNGKey(0)

    # (B, D, scale, N, window, row_tile_cap, valid_lengths)
    cases = [
        # lane-dense D, whole band (weff == N), single row tile (clipped path)
        (2, 128, 4, 16, 16, None, (64, 37)),
        # D < 128 (lane-padded in the wrapper), window < N
        (2, 32, 4, 16, 8, None, (64, 37)),
        # multiple row tiles: aligned full-tile stores + one clipped tile
        (2, 128, 4, 32, 8, 8, (128, 85)),
        # awkward (prime) N: padded row dim, all-clipped tiles, B == 1
        (1, 128, 4, 13, 8, 8, (33,)),
    ]

    for (B, D, scale, N, window, cap, lens) in cases:
        T = N * scale
        key, kf = jax.random.split(key)
        feats = jax.random.normal(kf, (B, T, D), dtype=jnp.float32)
        lengths = jnp.array(lens, dtype=jnp.int32)
        mask = (jnp.arange(T)[None, :] < lengths[:, None]).astype(jnp.float32)

        feat2d, bounds, mask2d = tan2d_proposal(
            feats, mask, downscale=scale, windows=(window,), row_tile_cap=cap)
        jax.block_until_ready((feat2d, bounds, mask2d))

        ref_f, ref_b, ref_m = _reference(feats, mask, scale, window)
        np.testing.assert_allclose(np.asarray(feat2d), ref_f,
                                   rtol=1e-5, atol=1e-5)
        np.testing.assert_array_equal(np.asarray(bounds), ref_b)
        np.testing.assert_allclose(np.asarray(mask2d), ref_m, rtol=0, atol=0)

    print("KERNEL_OK")
</pallas_src>

<mosaic_0001>
module attributes {stable_mosaic.version = 11 : i64} {
  func.func @_tan2d_place_kernel(%arg0: i32, %arg1: i32, %arg2: memref<1x1x16x31x128xf32, #tpu.memory_space<vmem>>, %arg3: memref<1x16x16x128xf32, #tpu.memory_space<vmem>>) attributes {dimension_semantics = [#tpu.dimension_semantics<parallel>, #tpu.dimension_semantics<parallel>], iteration_bounds = array<i64: 2, 1>, scalar_prefetch = 0 : i64, scratch_operands = 0 : i64, tpu.core_type = #tpu.core_type<tc>, window_params = [{transform_indices = @transform_0, window_bounds = array<i64: 1, 1, 16, 31, 128>}, {transform_indices = @transform_1, window_bounds = array<i64: 1, 16, 16, 128>}]} {
    %cst = arith.constant 0.000000e+00 : f32
    %0 = vector.broadcast %cst : f32 to vector<16x16x128xf32>
    %c0 = arith.constant 0 : index
    %c0_0 = arith.constant 0 : index
    %c0_1 = arith.constant 0 : index
    %c0_2 = arith.constant 0 : index
    %1 = vector.load %arg3[%c0, %c0_0, %c0_1, %c0_2] : memref<1x16x16x128xf32, #tpu.memory_space<vmem>>, vector<1x16x16x128xf32>
    %2 = vector.shape_cast %1 : vector<1x16x16x128xf32> to vector<16x16x128xf32>
    %3 = vector.shape_cast %0 : vector<16x16x128xf32> to vector<1x16x16x128xf32>
    tpu.vector_store %arg3[%c0, %c0_0, %c0_1, %c0_2], %3 {strides = array<i32>} : memref<1x16x16x128xf32, #tpu.memory_space<vmem>>, vector<1x16x16x128xf32>,
    %c0_i32 = arith.constant 0 : i32
    %4 = arith.cmpi eq, %arg1, %c0_i32 : i32
    %5 = arith.extui %4 : i1 to i32
    %c0_i32_3 = arith.constant 0 : i32
    %6 = arith.cmpi ne, %5, %c0_i32_3 : i32
    scf.if %6 {
      %c0_4 = arith.constant 0 : index
      %c0_5 = arith.constant 0 : index
      %c0_6 = arith.constant 0 : index
      %c0_7 = arith.constant 0 : index
      %c0_8 = arith.constant 0 : index
      %7 = vector.load %arg2[%c0_4, %c0_5, %c0_6, %c0_7, %c0_8] : memref<1x1x16x31x128xf32, #tpu.memory_space<vmem>>, vector<1x1x16x16x128xf32>
      %8 = vector.shape_cast %7 : vector<1x1x16x16x128xf32> to vector<16x16x128xf32>
      %c0_9 = arith.constant 0 : index
      %c0_10 = arith.constant 0 : index
      %c0_11 = arith.constant 0 : index
      %c0_12 = arith.constant 0 : index
      %9 = vector.load %arg3[%c0_9, %c0_10, %c0_11, %c0_12] : memref<1x16x16x128xf32, #tpu.memory_space<vmem>>, vector<1x16x16x128xf32>
      %10 = vector.shape_cast %9 : vector<1x16x16x128xf32> to vector<16x16x128xf32>
      %11 = vector.shape_cast %8 : vector<16x16x128xf32> to vector<1x16x16x128xf32>
      tpu.vector_store %arg3[%c0_9, %c0_10, %c0_11, %c0_12], %11 {strides = array<i32>} : memref<1x16x16x128xf32, #tpu.memory_space<vmem>>, vector<1x16x16x128xf32>,
    } else {
    }
    return
  }
  func.func @transform_0(%arg0: i32, %arg1: i32) -> (i32, i32, i32, i32, i32) {
    %c0_i32 = arith.constant 0 : i32
    %c0_i32_0 = arith.constant 0 : i32
    %c0_i32_1 = arith.constant 0 : i32
    %c0_i32_2 = arith.constant 0 : i32
    return %arg0, %arg1, %c0_i32, %c0_i32_0, %c0_i32_1 : i32, i32, i32, i32, i32
  }
  func.func @transform_1(%arg0: i32, %arg1: i32) -> (i32, i32, i32, i32) {
    %c0_i32 = arith.constant 0 : i32
    %c0_i32_0 = arith.constant 0 : i32
    %c0_i32_1 = arith.constant 0 : i32
    return %arg0, %arg1, %c0_i32, %c0_i32_0 : i32, i32, i32, i32
  }
}

</mosaic_0001>

<llo_original>
// kernel: tpu_custom_call.1
$region0: #{tpu_custom_call.1}
  #allocation0 [shape = 'u32[]', space=smem, size = 0x4, offset = 0x4, fixed_abs, tag = 'smem constant byte address 0x4 - core index']
  #allocation1 [shape = 'u32[72,128]{1,0:T(1,128)}', space=vmem, size = 0x9000, scoped, tag = 'internal scratch']
  %s0 = inlined_call_operand.vmem [shape: f32[2,1,16,31,128], index: 0, kind: input, shape index: {}]
  %s1 = inlined_call_operand.hbm [shape: f32[2,16,16,128], index: 1, kind: output, shape index: {}]
  %s2 = sld [smem:[#allocation0]]
  $region41: #{tpu_custom_call.1} parent=0
    _
  %s4 = ssub.s32 1, %s2
  %s5 = scalar_select 0, %s4, %s2
  $region1: #{tpu_custom_call.1} parent=0
    #allocation2 [shape = 'u8[262144]{0}', space=vmem, size = 0x40000, scoped, tag = 'output window, operand 0']
    #allocation3 [shape = 's32[2]{0}', space=sflag, size = 0x8, scoped, tag = 'scoped memory for tpu_custom_call.1']
    %6 = vsyncpa [#allocation3], 0
    %s7 = scalar_lea.sflag [#allocation3], 1
    %8 = vsyncpa %s7, 0
    loop: start=0, step=1, limit=4
    $region2: #{tpu_custom_call.1} parent=1 // loop_pre_header
      _
    $region3: #{tpu_custom_call.1} parent=1 // loop_header
      %s10 = sphi 0, %s14
      %p11 = scmp.ge.s32.totalorder %s10, 4
      %s17 = sphi 0, %s29
      %s18 = sphi 0, %s25
      %s19 = sphi 0, %s17
      %s20 = sphi 0, %s18
      %s21 = sphi 0, %s19
      %s22 = sphi 0, %s20
      %s34 = sphi 0, %s36
      %s37 = sphi 0, %s34
      %s38 = sphi 0, %s37
      %s54 = sphi 0, %s38
      %s62 = sphi 0, %s64
      %s65 = sphi 0, %s62
      %s66 = sphi 0, %s65
      %s82 = sphi 0, %s66
    $region4: #{tpu_custom_call.1} parent=1 // loop_header_branch
      %13 = sbr.rel (%p11) target = $region8
    $region5: #{tpu_custom_call.1} parent=1 // loop_body
      %s15 = ssub.s32 %s10, 1
      %s16 = ssub.s32 %s10, 2
      %s23 = sadd.s32 1, %s18
      %p24 = scmp.ge.s32.totalorder %s23, 1
      %s25 = scalar_select %p24, 0, %s23
      %s26 = sadd.s32 1, %s17
      %s27 = scalar_select %p24, %s26, %s17
      %p28 = scmp.ge.s32.totalorder %s27, 2
      %s29 = scalar_select %p28, 0, %s27
      %s30 = ssub.s32 %s17, %s29
      %s31 = ssub.s32 %s18, %s25
      %s32 = sor.u32 %s30, %s31
      %p33 = scmp.eq.s32.totalorder %s32, 0
      %s35 = sadd.s32 %s34, 1
      %s36 = scalar_select %p33, %s34, %s35
      %p39 = pneg %p33
      %p40 = scmp.eq.s32.totalorder %s10, 1
      %p41 = por %p39, %p40
      %p42 = scmp.ne.s32.totalorder %s34, %s37
      %p43 = scmp.eq.s32.totalorder %s10, 0
      %p44 = por %p42, %p43
      %p45 = scmp.ne.s32.totalorder %s34, %s37
      %p46 = scmp.eq.s32.totalorder %s15, 1
      %p47 = por %p45, %p46
      %p48 = scmp.ne.s32.totalorder %s37, %s38
      %p49 = scmp.eq.s32.totalorder %s15, 0
      %p50 = por %p48, %p49
      %p51 = scmp.ne.s32.totalorder %s37, %s38
      %p52 = scmp.eq.s32.totalorder %s16, 1
      %p53 = por %p51, %p52
      %p55 = scmp.ne.s32.totalorder %s38, %s54
      %p56 = scmp.eq.s32.totalorder %s16, 0
      %p57 = por %p55, %p56
      %s58 = ssub.s32 %s17, %s29
      %s59 = ssub.s32 %s18, %s25
      %s60 = sor.u32 %s58, %s59
      %p61 = scmp.eq.s32.totalorder %s60, 0
      %s63 = sadd.s32 %s62, 1
      %s64 = scalar_select %p61, %s62, %s63
      %p67 = pneg %p61
      %p68 = scmp.eq.s32.totalorder %s10, 1
      %p69 = por %p67, %p68
      %p70 = scmp.ne.s32.totalorder %s62, %s65
      %p71 = scmp.eq.s32.totalorder %s10, 0
      %p72 = por %p70, %p71
      %p73 = scmp.ne.s32.totalorder %s62, %s65
      %p74 = scmp.eq.s32.totalorder %s15, 1
      %p75 = por %p73, %p74
      %p76 = scmp.ne.s32.totalorder %s65, %s66
      %p77 = scmp.eq.s32.totalorder %s15, 0
      %p78 = por %p76, %p77
      %p79 = scmp.ne.s32.totalorder %s65, %s66
      %p80 = scmp.eq.s32.totalorder %s16, 1
      %p81 = por %p79, %p80
      %p83 = scmp.ne.s32.totalorder %s66, %s82
      %p84 = scmp.eq.s32.totalorder %s16, 0
      %p85 = por %p83, %p84
      %p86 = scmp.le.s32.totalorder 1, %s10
      %p87 = scmp.lt.s32.totalorder %s10, 3
      %p88 = pnand %p86, %p87
      %p89 = pneg %p88
      // Predicated region
      $region9: #{tpu_custom_call.1} parent=5 // pred_check
        _
      $region10: #{tpu_custom_call.1} parent=5 // pred_check_branch
        %91 = sbr.rel (%p88) target = $region12
      $region11: #{tpu_custom_call.1} parent=5 // pred_region
        %s92 = ssub.s32 %s10, 1
      $region12: #{tpu_custom_call.1} parent=5 // pred_fallthru
        _
      %p93 = scmp.lt.s32.totalorder %s10, 2
      // Predicated region
      $region13: #{tpu_custom_call.1} parent=5 // pred_check
        %p94 = pneg %p93
      $region14: #{tpu_custom_call.1} parent=5 // pred_check_branch
        %96 = sbr.rel (%p94) target = $region16
      $region15: #{tpu_custom_call.1} parent=5 // pred_region
        // Predicated region
        $region17: #{tpu_custom_call.1} parent=15 // pred_check
          %p97 = pneg %p44
        $region18: #{tpu_custom_call.1} parent=15 // pred_check_branch
          %99 = sbr.rel (%p97) target = $region20
        $region19: #{tpu_custom_call.1} parent=15 // pred_region
          %p100 = scmp.lt.s32.totalorder %s17, 1
          %s101 = scalar_select %p100, %s17, 1
          %p102 = scmp.lt.s32.totalorder %s18, 0
          %s103 = scalar_select %p102, %s18, 0
          %s104 = smul.addr %s103, 64
          %s105 = smul.addr %s101, 64
          %s106 = sadd.s32 %s104, %s105
          %s107 = smul.addr %s106, 8
          %s108 = scalar_lea.vmem %s0, %s107
        $region20: #{tpu_custom_call.1} parent=15 // pred_fallthru
          _
      $region16: #{tpu_custom_call.1} parent=5 // pred_fallthru
        _
      %p109 = scmp.le.s32.totalorder 1, %s10
      %p110 = scmp.lt.s32.totalorder %s10, 3
      %p111 = pnand %p109, %p110
      %p112 = pneg %p111
      // Predicated region
      $region21: #{tpu_custom_call.1} parent=5 // pred_check
        _
      $region22: #{tpu_custom_call.1} parent=5 // pred_check_branch
        %114 = sbr.rel (%p111) target = $region24
      $region23: #{tpu_custom_call.1} parent=5 // pred_region
        %s115 = ssub.s32 %s10, 1
        %p116 = scmp.lt.s32.totalorder %s19, 1
        %s117 = scalar_select %p116, %s19, 1
        %p118 = scmp.lt.s32.totalorder %s20, 0
        %s119 = scalar_select %p118, %s20, 0
        %s120 = smul.addr %s119, 64
        %s121 = smul.addr %s117, 64
        %s122 = sadd.s32 %s120, %s121
        %s123 = smul.addr %s122, 8
        %s124 = scalar_lea.vmem %s0, %s123
        %p125 = pneg %p50
        %p126 = pneg %p47
        %p127 = pneg %p78
        %p128 = pneg %p75
        %s129 = sand.u32 %s65, 1
        %s130 = scalar_lea.sflag [#allocation3], %s129
        %s131 = sand.u32 %s65, 1
        %s132 = smul.addr %s131, 256
        %s133 = scalar_lea.vmem [#allocation2], %s132
        %p134 = scmp.lt.s32.totalorder %s19, 1
        %s135 = scalar_select %p134, %s19, 1
        %p136 = scmp.lt.s32.totalorder %s20, 0
        %s137 = scalar_select %p136, %s20, 0
        %s138 = smul.addr %s137, 64
        %s139 = smul.addr %s135, 64
        %s140 = sadd.s32 %s138, %s139
        %s141 = smul.addr %s140, 8
        %s142 = scalar_lea.vmem %s0, %s141
        %s143 = smul.u32 16, %s20
        %144 = vst [vmem:[%s133] sm:$0xff] 0.0
        %145 = vst [vmem:[%s133 + $0x8] sm:$0xff] 0.0
        %146 = vst [vmem:[%s133 + $0x10] sm:$0xff] 0.0
        %147 = vst [vmem:[%s133 + $0x18] sm:$0xff] 0.0
        %148 = vst [vmem:[%s133 + $0x20] sm:$0xff] 0.0
        %149 = vst [vmem:[%s133 + $0x28] sm:$0xff] 0.0
        %150 = vst [vmem:[%s133 + $0x30] sm:$0xff] 0.0
        %151 = vst [vmem:[%s133 + $0x38] sm:$0xff] 0.0
        %152 = vst [vmem:[%s133 + $0x40] sm:$0xff] 0.0
        %153 = vst [vmem:[%s133 + $0x48] sm:$0xff] 0.0
        %154 = vst [vmem:[%s133 + $0x50] sm:$0xff] 0.0
        %155 = vst [vmem:[%s133 + $0x58] sm:$0xff] 0.0
        %156 = vst [vmem:[%s133 + $0x60] sm:$0xff] 0.0
        %157 = vst [vmem:[%s133 + $0x68] sm:$0xff] 0.0
        %158 = vst [vmem:[%s133 + $0x70] sm:$0xff] 0.0
        %159 = vst [vmem:[%s133 + $0x78] sm:$0xff] 0.0
        %160 = vst [vmem:[%s133 + $0x80] sm:$0xff] 0.0
        %161 = vst [vmem:[%s133 + $0x88] sm:$0xff] 0.0
        %162 = vst [vmem:[%s133 + $0x90] sm:$0xff] 0.0
        %163 = vst [vmem:[%s133 + $0x98] sm:$0xff] 0.0
        %164 = vst [vmem:[%s133 + $0xa0] sm:$0xff] 0.0
        %165 = vst [vmem:[%s133 + $0xa8] sm:$0xff] 0.0
        %166 = vst [vmem:[%s133 + $0xb0] sm:$0xff] 0.0
        %167 = vst [vmem:[%s133 + $0xb8] sm:$0xff] 0.0
        %168 = vst [vmem:[%s133 + $0xc0] sm:$0xff] 0.0
        %169 = vst [vmem:[%s133 + $0xc8] sm:$0xff] 0.0
        %170 = vst [vmem:[%s133 + $0xd0] sm:$0xff] 0.0
        %171 = vst [vmem:[%s133 + $0xd8] sm:$0xff] 0.0
        %172 = vst [vmem:[%s133 + $0xe0] sm:$0xff] 0.0
        %173 = vst [vmem:[%s133 + $0xe8] sm:$0xff] 0.0
        %174 = vst [vmem:[%s133 + $0xf0] sm:$0xff] 0.0
        %175 = vst [vmem:[%s133 + $0xf8] sm:$0xff] 0.0
        %p176 = scmp.eq.s32.totalorder %s20, 0
        // Predicated region
        $region25: #{tpu_custom_call.1} parent=23 // pred_check
          %p177 = pneg %p176
        $region26: #{tpu_custom_call.1} parent=23 // pred_check_branch
          %179 = sbr.rel (%p177) target = $region28
        $region27: #{tpu_custom_call.1} parent=23 // pred_region
          %v180 = vld [vmem:[%s142] sm:$0xff]
          %v181 = vld [vmem:[%s142 + $0x8] sm:$0xff]
          %v182 = vld [vmem:[%s142 + $0x20] sm:$0xff]
          %v183 = vld [vmem:[%s142 + $0x28] sm:$0xff]
          %v184 = vld [vmem:[%s142 + $0x40] sm:$0xff]
          %v185 = vld [vmem:[%s142 + $0x48] sm:$0xff]
          %v186 = vld [vmem:[%s142 + $0x60] sm:$0xff]
          %v187 = vld [vmem:[%s142 + $0x68] sm:$0xff]
          %v188 = vld [vmem:[%s142 + $0x80] sm:$0xff]
          %v189 = vld [vmem:[%s142 + $0x88] sm:$0xff]
          %v190 = vld [vmem:[%s142 + $0xa0] sm:$0xff]
          %v191 = vld [vmem:[%s142 + $0xa8] sm:$0xff]
          %v192 = vld [vmem:[%s142 + $0xc0] sm:$0xff]
          %v193 = vld [vmem:[%s142 + $0xc8] sm:$0xff]
          %v194 = vld [vmem:[%s142 + $0xe0] sm:$0xff]
          %v195 = vld [vmem:[%s142 + $0xe8] sm:$0xff]
          %v196 = vld [vmem:[%s142 + $0x100] sm:$0xff]
          %v197 = vld [vmem:[%s142 + $0x108] sm:$0xff]
          %v198 = vld [vmem:[%s142 + $0x120] sm:$0xff]
          %v199 = vld [vmem:[%s142 + $0x128] sm:$0xff]
          %v200 = vld [vmem:[%s142 + $0x140] sm:$0xff]
          %v201 = vld [vmem:[%s142 + $0x148] sm:$0xff]
          %v202 = vld [vmem:[%s142 + $0x160] sm:$0xff]
          %v203 = vld [vmem:[%s142 + $0x168] sm:$0xff]
          %v204 = vld [vmem:[%s142 + $0x180] sm:$0xff]
          %v205 = vld [vmem:[%s142 + $0x188] sm:$0xff]
          %v206 = vld [vmem:[%s142 + $0x1a0] sm:$0xff]
          %v207 = vld [vmem:[%s142 + $0x1a8] sm:$0xff]
          %v208 = vld [vmem:[%s142 + $0x1c0] sm:$0xff]
          %v209 = vld [vmem:[%s142 + $0x1c8] sm:$0xff]
          %v210 = vld [vmem:[%s142 + $0x1e0] sm:$0xff]
          %v211 = vld [vmem:[%s142 + $0x1e8] sm:$0xff]
          %212 = vst [vmem:[%s133] sm:$0xff] %v180
          %213 = vst [vmem:[%s133 + $0x8] sm:$0xff] %v181
          %214 = vst [vmem:[%s133 + $0x10] sm:$0xff] %v182
          %215 = vst [vmem:[%s133 + $0x18] sm:$0xff] %v183
          %216 = vst [vmem:[%s133 + $0x20] sm:$0xff] %v184
          %217 = vst [vmem:[%s133 + $0x28] sm:$0xff] %v185
          %218 = vst [vmem:[%s133 + $0x30] sm:$0xff] %v186
          %219 = vst [vmem:[%s133 + $0x38] sm:$0xff] %v187
          %220 = vst [vmem:[%s133 + $0x40] sm:$0xff] %v188
          %221 = vst [vmem:[%s133 + $0x48] sm:$0xff] %v189
          %222 = vst [vmem:[%s133 + $0x50] sm:$0xff] %v190
          %223 = vst [vmem:[%s133 + $0x58] sm:$0xff] %v191
          %224 = vst [vmem:[%s133 + $0x60] sm:$0xff] %v192
          %225 = vst [vmem:[%s133 + $0x68] sm:$0xff] %v193
          %226 = vst [vmem:[%s133 + $0x70] sm:$0xff] %v194
          %227 = vst [vmem:[%s133 + $0x78] sm:$0xff] %v195
          %228 = vst [vmem:[%s133 + $0x80] sm:$0xff] %v196
          %229 = vst [vmem:[%s133 + $0x88] sm:$0xff] %v197
          %230 = vst [vmem:[%s133 + $0x90] sm:$0xff] %v198
          %231 = vst [vmem:[%s133 + $0x98] sm:$0xff] %v199
          %232 = vst [vmem:[%s133 + $0xa0] sm:$0xff] %v200
          %233 = vst [vmem:[%s133 + $0xa8] sm:$0xff] %v201
          %234 = vst [vmem:[%s133 + $0xb0] sm:$0xff] %v202
          %235 = vst [vmem:[%s133 + $0xb8] sm:$0xff] %v203
          %236 = vst [vmem:[%s133 + $0xc0] sm:$0xff] %v204
          %237 = vst [vmem:[%s133 + $0xc8] sm:$0xff] %v205
          %238 = vst [vmem:[%s133 + $0xd0] sm:$0xff] %v206
          %239 = vst [vmem:[%s133 + $0xd8] sm:$0xff] %v207
          %240 = vst [vmem:[%s133 + $0xe0] sm:$0xff] %v208
          %241 = vst [vmem:[%s133 + $0xe8] sm:$0xff] %v209
          %242 = vst [vmem:[%s133 + $0xf0] sm:$0xff] %v210
          %243 = vst [vmem:[%s133 + $0xf8] sm:$0xff] %v211
        $region28: #{tpu_custom_call.1} parent=23 // pred_fallthru
          _
        %s244 = sand.u32 %s65, 1
        %s245 = scalar_lea.sflag [#allocation3], %s244
        %s246 = sand.u32 %s65, 1
        %s247 = smul.addr %s246, 256
        %s248 = scalar_lea.vmem [#allocation2], %s247
        // Predicated region
        $region29: #{tpu_custom_call.1} parent=23 // pred_check
          %p249 = pneg %p75
        $region30: #{tpu_custom_call.1} parent=23 // pred_check_branch
          %251 = sbr.rel (%p249) target = $region32
        $region31: #{tpu_custom_call.1} parent=23 // pred_region
          %s252 = smul.u32 16, %s20
          %254 = vsyncadd %s245, 0
          %s255 = smul.addr %s252, 2
          %s256 = smul.addr %s19, 32
          %s257 = sadd.s32 %s255, %s256
          %s258 = smul.addr %s257, 8
          %s259 = scalar_lea.hbm %s1, %s258
          %s260 = sshll.u32 %s248, 4
          %s261 = int_to_ptr.vmem [resolvable:$true] %s260
          %s262 = sshll.u32 %s259, 4
          %s263 = int_to_ptr.hbm [resolvable:$true] %s262
          %268 = dma.vmem_to_hbm [thread:$0]  %s261, 4096, %s263, %s245, 128, 128, 8
        $region32: #{tpu_custom_call.1} parent=23 // pred_fallthru
          _
      $region24: #{tpu_custom_call.1} parent=5 // pred_fallthru
        _
      %p269 = scmp.le.s32.totalorder 2, %s10
      // Predicated region
      $region33: #{tpu_custom_call.1} parent=5 // pred_check
        %p270 = pneg %p269
      $region34: #{tpu_custom_call.1} parent=5 // pred_check_branch
        %272 = sbr.rel (%p270) target = $region36
      $region35: #{tpu_custom_call.1} parent=5 // pred_region
        %s273 = ssub.s32 %s10, 2
        // Predicated region
        $region37: #{tpu_custom_call.1} parent=35 // pred_check
          %p274 = pneg %p81
        $region38: #{tpu_custom_call.1} parent=35 // pred_check_branch
          %276 = sbr.rel (%p274) target = $region40
        $region39: #{tpu_custom_call.1} parent=35 // pred_region
          %s277 = sand.u32 %s66, 1
          %s278 = scalar_lea.sflag [#allocation3], %s277
          %s279 = sand.u32 %s66, 1
          %s280 = smul.addr %s279, 256
          %s281 = scalar_lea.vmem [#allocation2], %s280
          %283 = dma.done %s278, 4096
        $region40: #{tpu_custom_call.1} parent=35 // pred_fallthru
          _
      $region36: #{tpu_custom_call.1} parent=5 // pred_fallthru
        _
    $region6: #{tpu_custom_call.1} parent=1 // loop_footer
      %s14 = sadd.s32 1, %s10
    $region7: #{tpu_custom_call.1} parent=1 // loop_footer_branch
      %9 = sbr.rel target = $region3
    $region8: #{tpu_custom_call.1} parent=1 // loop_exit
      _
    %284 = vsyncpa [#allocation3], 1
    %s285 = scalar_lea.sflag [#allocation3], 1
    %286 = vsyncpa %s285, 1

</llo_original>
